<compile_context>
chip_gen: v5e
topology: v5e:2x2
jax: 0.10.0
libtpu: 0.0.40
codegen_flags: <defaults>
</compile_context>

<pallas_src>
import functools

import jax
import jax.numpy as jnp
from jax.experimental import pallas as pl
from jax.experimental.pallas import tpu as pltpu

_TARGET_TILE_BYTES = 4 * 1024 * 1024  # ~4 MiB per output buffer


def _round_up(x: int, m: int) -> int:
    return ((x + m - 1) // m) * m


def _cdiv(a: int, b: int) -> int:
    return (a + b - 1) // b


def _persistent_memory_kernel(mem_ref, out_ref):
    # mem_ref: (1, 1, num_slots) VMEM row, pinned at block (0, 0, 0) for every
    # grid step.  out_ref: (1, tb, num_slots) output tile.
    # The broadcast (PyTorch `expand`) replicates the memory row across the
    # batch (sublane) axis.  The last dim is the full, un-padded num_slots, so
    # only the useful bytes are stored (the kernel is purely HBM-store-bound).
    out_ref[...] = jnp.broadcast_to(mem_ref[...], out_ref.shape)


@functools.partial(jax.jit, static_argnames=("batch_size",))
def persistent_memory_forward(memory: jax.Array, batch_size: int) -> jax.Array:
    """memory: (num_slots,).  Returns (1, batch_size, num_slots)."""
    num_slots = memory.shape[0]
    dtype = memory.dtype
    itemsize = jnp.dtype(dtype).itemsize

    # dtype-aware sublane packing: 8 rows for 4-byte, 16 for 2-byte, 32 for
    # 1-byte dtypes, so stores stay full packed tiles on all generations.
    sublane = 8 * max(1, 4 // itemsize)

    row_bytes = max(num_slots * itemsize, 1)
    batch_p = _round_up(batch_size, sublane)

    # Byte-budgeted batch tile: ~4 MiB per output buffer (double-buffered ->
    # ~8 MiB), clamped to the sublane-aligned batch so we never over-tile.
    tb = (_TARGET_TILE_BYTES // row_bytes) // sublane * sublane
    tb = max(sublane, min(batch_p, tb))

    n_tiles = _cdiv(batch_p, tb)
    # Prefer >= 2 tiles (and an even count) when the batch allows, so the
    # "parallel" batch axis shards across both v7x TensorCores and writeback
    # DMAs overlap with the next tile's stores.
    if batch_p >= 2 * sublane:
        n_tiles = max(n_tiles, 2)
    if n_tiles > 1 and n_tiles % 2 == 1:
        n_tiles += 1
    tb = _round_up(_cdiv(batch_p, n_tiles), sublane)
    batch_pp = n_tiles * tb  # padding waste bounded by < n_tiles * sublane rows

    mem3d = memory.reshape(1, 1, num_slots)

    bytes_accessed = (batch_pp * num_slots + num_slots) * itemsize
    cost = pl.CostEstimate(flops=0, transcendentals=0,
                           bytes_accessed=bytes_accessed)

    # Only raise the scoped-VMEM limit for pathologically wide rows; otherwise
    # the ~8 MiB double-buffered output fits every generation's default.
    vmem_needed = 2 * (tb * num_slots + num_slots) * itemsize
    vmem_limit = vmem_needed + (1 << 20) if vmem_needed > (12 << 20) else None

    out_padded = pl.pallas_call(
        _persistent_memory_kernel,
        out_shape=jax.ShapeDtypeStruct((1, batch_pp, num_slots), dtype),
        grid_spec=pltpu.PrefetchScalarGridSpec(
            num_scalar_prefetch=0,
            grid=(n_tiles,),
            in_specs=[pl.BlockSpec((1, 1, num_slots), lambda i: (0, 0, 0))],
            out_specs=pl.BlockSpec((1, tb, num_slots), lambda i: (0, i, 0)),
        ),
        compiler_params=pltpu.CompilerParams(
            dimension_semantics=("parallel",),  # batch tiles over v7x's 2 TCs
            vmem_limit_bytes=vmem_limit,
        ),
        cost_estimate=cost,
    )(mem3d)

    if batch_pp == batch_size:
        return out_padded  # wrapper is pure metadata: nothing to do
    # Contiguous batch-prefix slice only (no lane crop, no reshape).
    return out_padded[:, :batch_size, :]


if __name__ == "__main__":
    # Module config (small, consistent with the __init__ signature).
    num_slots = 8
    d_model = 32  # unused by the module's forward, kept for fidelity
    batch_size = 2

    # Deterministic parameter init (stand-in for torch.randn(num_slots)).
    key = jax.random.PRNGKey(0)
    memory = jax.random.normal(key, (num_slots,), dtype=jnp.float32)

    out = persistent_memory_forward(memory, batch_size)
    out = jax.block_until_ready(out)

    # Correctness check against the pure-JAX reference of the PyTorch forward.
    ref = jnp.broadcast_to(memory[None, :], (batch_size, num_slots))[None, ...]
    assert out.shape == (1, batch_size, num_slots), out.shape
    assert jnp.allclose(out, ref), "mismatch vs reference broadcast"

    print("KERNEL_OK")
</pallas_src>

<mosaic_0001>
module attributes {stable_mosaic.version = 11 : i64} {
  func.func @_persistent_memory_kernel(%arg0: i32, %arg1: memref<1x1x8xf32, #tpu.memory_space<vmem>>, %arg2: memref<1x8x8xf32, #tpu.memory_space<vmem>>) attributes {dimension_semantics = [#tpu.dimension_semantics<parallel>], iteration_bounds = array<i64: 1>, scalar_prefetch = 0 : i64, scratch_operands = 0 : i64, tpu.core_type = #tpu.core_type<tc>, window_params = [{pipeline_mode = #tpu.pipeline_mode<synchronous>, transform_indices = @transform_0, window_bounds = array<i64: 1, 1, 8>}, {transform_indices = @transform_1, window_bounds = array<i64: 1, 8, 8>}]} {
    %c0 = arith.constant 0 : index
    %c0_0 = arith.constant 0 : index
    %c0_1 = arith.constant 0 : index
    %0 = vector.load %arg1[%c0, %c0_0, %c0_1] : memref<1x1x8xf32, #tpu.memory_space<vmem>>, vector<1x1x8xf32>
    %1 = vector.shape_cast %0 : vector<1x1x8xf32> to vector<1x1x8xf32>
    %2 = vector.broadcast %1 : vector<1x1x8xf32> to vector<1x8x8xf32>
    %c0_2 = arith.constant 0 : index
    %c0_3 = arith.constant 0 : index
    %c0_4 = arith.constant 0 : index
    %3 = vector.load %arg2[%c0_2, %c0_3, %c0_4] : memref<1x8x8xf32, #tpu.memory_space<vmem>>, vector<1x8x8xf32>
    tpu.vector_store %arg2[%c0_2, %c0_3, %c0_4], %2 {strides = array<i32>} : memref<1x8x8xf32, #tpu.memory_space<vmem>>, vector<1x8x8xf32>,
    return
  }
  func.func @transform_0(%arg0: i32) -> (i32, i32, i32) {
    %c0_i32 = arith.constant 0 : i32
    %c0_i32_0 = arith.constant 0 : i32
    %c0_i32_1 = arith.constant 0 : i32
    %c0_i32_2 = arith.constant 0 : i32
    return %c0_i32, %c0_i32_0, %c0_i32_1 : i32, i32, i32
  }
  func.func @transform_1(%arg0: i32) -> (i32, i32, i32) {
    %c0_i32 = arith.constant 0 : i32
    %c0_i32_0 = arith.constant 0 : i32
    %c0_i32_1 = arith.constant 0 : i32
    return %c0_i32, %arg0, %c0_i32_0 : i32, i32, i32
  }
}

</mosaic_0001>

<llo_original>
// kernel: persistent_memory_forward.1
$region0: #{persistent_memory_forward.1}
  #allocation0 [shape = 'u32[]', space=smem, size = 0x4, offset = 0x4, fixed_abs, tag = 'smem constant byte address 0x4 - core index']
  #allocation1 [shape = 'u32[72,128]{1,0:T(1,128)}', space=vmem, size = 0x9000, scoped, tag = 'internal scratch']
  %s0 = inlined_call_operand.hbm [shape: f32[1,1,8], index: 0, kind: input, shape index: {}]
  %s1 = inlined_call_operand.vmem [shape: f32[1,8,8], index: 1, kind: output, shape index: {}]
  %s2 = sld [smem:[#allocation0]]
  $region18: #{persistent_memory_forward.1} parent=0
    _
  %s4 = ssub.s32 1, %s2
  %s5 = scalar_select 0, %s4, %s2
  $region1: #{persistent_memory_forward.1} parent=0
    #allocation2 [shape = 'u8[512]{0}', space=vmem, size = 0x400, scoped, tag = 'input window, operand 0, single buffered']
    #allocation3 [shape = 's32[1]{0}', space=sflag, size = 0x4, scoped, tag = 'scoped memory for persistent_memory_forward.1']
    %6 = vsyncpa [#allocation3], 0
    // Predicated region
    $region2: #{persistent_memory_forward.1} parent=1 // pred_check
      _
    $region3: #{persistent_memory_forward.1} parent=1 // pred_check_branch
      %8 = sbr.rel (0) target = $region5
    $region4: #{persistent_memory_forward.1} parent=1 // pred_region
      %10 = vsyncadd [#allocation3], 0
      %s12 = sshll.u32 %s0, 4
      %s13 = int_to_ptr.hbm [resolvable:$true] %s12
      %s14 = sshll.u32 [#allocation2], 4
      %s15 = int_to_ptr.vmem [resolvable:$true] %s14
      %17 = dma.hbm_to_vmem [thread:$0]  %s13, 16, %s15, [#allocation3]
    $region5: #{persistent_memory_forward.1} parent=1 // pred_fallthru
      _
    // Predicated region
    $region6: #{persistent_memory_forward.1} parent=1 // pred_check
      _
    $region7: #{persistent_memory_forward.1} parent=1 // pred_check_branch
      %19 = sbr.rel (0) target = $region9
    $region8: #{persistent_memory_forward.1} parent=1 // pred_region
      %21 = dma.done [#allocation3], 16
    $region9: #{persistent_memory_forward.1} parent=1 // pred_fallthru
      _
    %v22 = vld [vmem:[#allocation2] sm:$0x1]
    %v24 = vperm.slane %v22, 0
    %vm26 = vcmask 64512
    %27 = vst.msk [vmem:[%s1] sm:$0xff] %vm26, %v24
    // Predicated region
    $region10: #{persistent_memory_forward.1} parent=1 // pred_check
      _
    $region11: #{persistent_memory_forward.1} parent=1 // pred_check_branch
      %29 = sbr.rel (0) target = $region13
    $region12: #{persistent_memory_forward.1} parent=1 // pred_region
      _
    $region13: #{persistent_memory_forward.1} parent=1 // pred_fallthru
      _
    // Predicated region
    $region14: #{persistent_memory_forward.1} parent=1 // pred_check
      _
    $region15: #{persistent_memory_forward.1} parent=1 // pred_check_branch
      %31 = sbr.rel (0) target = $region17
    $region16: #{persistent_memory_forward.1} parent=1 // pred_region
      _
    $region17: #{persistent_memory_forward.1} parent=1 // pred_fallthru
      _
    %32 = vsyncpa [#allocation3], 1

</llo_original>
